<compile_context>
chip_gen: v6e
topology: v6e:2x2x1
jax: 0.10.0
libtpu: 0.0.40
codegen_flags: <defaults>
</compile_context>

<pallas_src>
import functools

import jax
import jax.numpy as jnp
from jax.experimental import pallas as pl
from jax.experimental.pallas import tpu as pltpu


def _round_up(n: int, m: int) -> int:
    return ((n + m - 1) // m) * m


def cellnet_cal_kernel(x_ref, w1_ref, b1_ref, w2_ref, b2_ref,
                       h_ref, sig_ref, logit_ref, soft_ref,
                       *, n_cls, compute_dtype, approx_recip):
    # x_ref:  (TM, F) f32   w1_ref: (F, H) f32   b1_ref: (1, H) f32
    # w2_ref: (H, 2C) f32   b2_ref: (1, 2C) f32
    # outputs: h_ref/sig_ref (TM, H),  logit_ref/soft_ref (TM, C)
    # All math is row-confined: boundary-block rows beyond N are undefined and must
    # never feed a cross-row reduction.
    x = x_ref[...].astype(compute_dtype)          # cast hidden under the input DMA
    w1 = w1_ref[...].astype(compute_dtype)
    h = jnp.dot(x, w1, preferred_element_type=jnp.float32)
    h = jnp.maximum(h + b1_ref[...], 0.0)         # feat_extract -> embeddings (f32)

    # classifier (minus softmax) and calibration_digit folded into one matmul:
    #   z[:, :C] = pred_logits,  z[:, C:] = calibration_digit(pred_logits)
    w2 = w2_ref[...].astype(compute_dtype)
    z = jnp.dot(h.astype(compute_dtype), w2,
                preferred_element_type=jnp.float32) + b2_ref[...]
    pred_logits = z[:, :n_cls]
    cal = z[:, n_cls:]

    cal = cal - jnp.max(cal, axis=-1, keepdims=True)       # stable softmax (row-wise)
    e = jnp.exp(cal)
    inv_den = pl.reciprocal(jnp.sum(e, axis=-1, keepdims=True), approx=approx_recip)
    soft = e * inv_den                                      # calibrated predictions

    # sigmoid(h); h >= 0 post-ReLU so exp(-h) in (0, 1] -> no overflow. EUP reciprocal.
    sig = pl.reciprocal(1.0 + jnp.exp(-h), approx=approx_recip)

    h_ref[...] = h.astype(h_ref.dtype)
    sig_ref[...] = sig.astype(sig_ref.dtype)
    logit_ref[...] = pred_logits.astype(logit_ref.dtype)
    soft_ref[...] = soft.astype(soft_ref.dtype)


def shared_patch_net_cal(x, params, *, tm=16384,
                         compute_dtype=jnp.bfloat16,
                         out_dtype=jnp.bfloat16):
    """x: (B, O, F). Returns the SharedPatchNetCal.forward dict:
       {'logits': {'predictions': (B,O,C), 'styles': (B,O,H), 'embeddings': (B,O,H)},
        'predictions': (B,O,C), 'styles': (B,O,H)}.

    out_dtype defaults to bf16 (halves the dominant writeback HBM traffic); pass
    out_dtype=jnp.float32 when downstream needs full-precision embeddings/logits."""
    w1, b1 = params["w1"], params["b1"]
    w2, b2 = params["w2"], params["b2"]
    wc, bc = params["wc"], params["bc"]

    B, O, F = x.shape
    H = w1.shape[1]
    C = w2.shape[1]
    N = B * O

    # TODO(synk): the torch forward's host-side "nans in the weights!" debug print
    # (torch.isnan over parameters) is omitted; it does not affect the math.

    # Fold Platt calibration into the classifier (both linear; tiny f32 matmuls):
    #   cal = (h @ W2 + b2) @ Wc + bc = h @ (W2 @ Wc) + (b2 @ Wc + bc)
    w2p = jnp.concatenate([w2, w2 @ wc], axis=1).astype(jnp.float32)       # (H, 2C)
    b2p = jnp.concatenate([b2, b2 @ wc + bc], axis=1).astype(jnp.float32)  # (1, 2C)

    x2 = x.reshape(N, F)     # free metadata reshape; x keeps its original dtype (f32)

    # Row tiling: largest tile <= tm, but keep >=2 grid steps whenever there is enough
    # work so v7x can shard the "parallel" row axis across its 2 TensorCores.  The cdiv
    # grid runs over the unpadded rows; Pallas masks the boundary block (no jnp.pad and
    # no output slicing pass).
    align = 16                               # sublane-aligned row blocks for f32/bf16
    if N > 2 * align:
        tm_eff = min(tm, _round_up(pl.cdiv(N, 2), align))
    else:
        tm_eff = _round_up(max(N, 1), align)
    num_tiles = pl.cdiv(N, tm_eff)

    # Explicit VMEM budget: double-buffered x + output tiles plus ~6 h-sized f32
    # compiler temporaries, capped at 40 MiB so it also fits v7x's 64 MiB VMEM
    # (raises the 16/32 MiB scoped defaults on v5e/v6e, which have 128 MiB).
    x_bytes = tm_eff * F * x2.dtype.itemsize
    out_bytes = tm_eff * (2 * H + 2 * C) * jnp.dtype(out_dtype).itemsize
    tmp_bytes = 6 * tm_eff * H * 4
    vmem_budget = int(min(40 * 1024 * 1024,
                          max(32 * 1024 * 1024,
                              2 * (x_bytes + out_bytes) + tmp_bytes + (1 << 20))))

    kernel = functools.partial(
        cellnet_cal_kernel, n_cls=C, compute_dtype=compute_dtype,
        approx_recip=(compute_dtype != jnp.float32))

    h_out, sig_out, logit_out, soft_out = pl.pallas_call(
        kernel,
        out_shape=(
            jax.ShapeDtypeStruct((N, H), out_dtype),   # embeddings / styles logits
            jax.ShapeDtypeStruct((N, H), out_dtype),   # sigmoid(styles)
            jax.ShapeDtypeStruct((N, C), out_dtype),   # logits['predictions']
            jax.ShapeDtypeStruct((N, C), out_dtype),   # calibrated softmax
        ),
        grid_spec=pltpu.PrefetchScalarGridSpec(
            num_scalar_prefetch=0,
            grid=(num_tiles,),
            in_specs=[
                # x rows tiled; default 2-deep buffering (bandwidth-bound, deeper
                # buffering would only burn VMEM better spent on a larger tile).
                pl.BlockSpec((tm_eff, F), lambda i: (i, 0)),
                pl.BlockSpec((F, H), lambda i: (0, 0)),        # W1 resident
                pl.BlockSpec((1, H), lambda i: (0, 0)),        # b1
                pl.BlockSpec((H, 2 * C), lambda i: (0, 0)),    # [W2 | W2@Wc] resident
                pl.BlockSpec((1, 2 * C), lambda i: (0, 0)),    # [b2 | b2@Wc+bc]
            ],
            out_specs=(
                pl.BlockSpec((tm_eff, H), lambda i: (i, 0)),
                pl.BlockSpec((tm_eff, H), lambda i: (i, 0)),
                pl.BlockSpec((tm_eff, C), lambda i: (i, 0)),
                pl.BlockSpec((tm_eff, C), lambda i: (i, 0)),
            ),
        ),
        compiler_params=pltpu.CompilerParams(
            dimension_semantics=("parallel",),   # independent row tiles (v7x: 2 TCs)
            vmem_limit_bytes=vmem_budget,
        ),
    )(x2, w1.astype(jnp.float32), b1.astype(jnp.float32), w2p, b2p)

    logits = {
        "predictions": logit_out.reshape(B, O, C),
        "styles": h_out.reshape(B, O, H),    # style_clf = Identity -> styles logits == h
        "embeddings": h_out.reshape(B, O, H),
    }
    return {
        "logits": logits,
        "predictions": soft_out.reshape(B, O, C),
        "styles": sig_out.reshape(B, O, H),
    }


def init_params(key, F, H, C):
    k1, k2, k3, k4, k5, k6 = jax.random.split(key, 6)
    return {
        "w1": jax.random.normal(k1, (F, H), jnp.float32) * 0.1,
        "b1": jax.random.normal(k2, (1, H), jnp.float32) * 0.1,
        "w2": jax.random.normal(k3, (H, C), jnp.float32) * 0.1,
        "b2": jax.random.normal(k4, (1, C), jnp.float32) * 0.1,
        "wc": jax.random.normal(k5, (C, C), jnp.float32) * 0.1,
        "bc": jax.random.normal(k6, (1, C), jnp.float32) * 0.1,
    }


def reference(x, params):
    """Pure-JAX SharedPatchNetCal.forward (unfused, f32 throughout)."""
    B, O, F = x.shape
    x2 = x.reshape(B * O, F)
    h = jnp.maximum(x2 @ params["w1"] + params["b1"], 0.0)
    pred_logits = h @ params["w2"] + params["b2"]
    cal = pred_logits @ params["wc"] + params["bc"]
    cal = cal - jnp.max(cal, axis=-1, keepdims=True)
    e = jnp.exp(cal)
    soft = e / jnp.sum(e, axis=-1, keepdims=True)
    sig = 1.0 / (1.0 + jnp.exp(-h))
    H = h.shape[-1]
    C = pred_logits.shape[-1]
    return {
        "logits": {
            "predictions": pred_logits.reshape(B, O, C),
            "styles": h.reshape(B, O, H),
            "embeddings": h.reshape(B, O, H),
        },
        "predictions": soft.reshape(B, O, C),
        "styles": sig.reshape(B, O, H),
    }


def _check(out, ref, atol, rtol=0.0):
    pairs = [
        (out["predictions"], ref["predictions"]),
        (out["styles"], ref["styles"]),
        (out["logits"]["predictions"], ref["logits"]["predictions"]),
        (out["logits"]["styles"], ref["logits"]["styles"]),
        (out["logits"]["embeddings"], ref["logits"]["embeddings"]),
    ]
    for a, b in pairs:
        assert a.shape == b.shape, (a.shape, b.shape)
        ok = jnp.allclose(a.astype(jnp.float32), b, atol=atol, rtol=rtol)
        assert bool(ok), (a.shape, atol)


if __name__ == "__main__":
    key = jax.random.PRNGKey(0)
    kx, kp, kx2 = jax.random.split(key, 3)

    # Small shapes consistent with the module: B x O x F, H hidden, C classes.
    B, O, F, H, C = 2, 8, 32, 32, 4
    x = jax.random.normal(kx, (B, O, F), jnp.float32)
    params = init_params(kp, F, H, C)

    # 1) Full-precision path (explicit opt-in): f32 matmuls, exact reciprocal,
    #    f32 outputs -> tight correctness check, single-step grid.
    out = shared_patch_net_cal(x, params, compute_dtype=jnp.float32,
                               out_dtype=jnp.float32)
    jax.block_until_ready(out)
    ref = reference(x, params)
    assert out["predictions"].shape == (B, O, C)
    assert out["styles"].shape == (B, O, H)
    assert out["logits"]["embeddings"].shape == (B, O, H)
    _check(out, ref, atol=2e-3)

    # 2) Default fast path (bf16 matmul inputs + bf16 outputs), awkward B*O so the
    #    cdiv grid runs 2 steps with a masked boundary block (no padding / slicing).
    B2, O2 = 3, 21                                   # B*O = 63 (not a tile multiple)
    x_b = jax.random.normal(kx2, (B2, O2, F), jnp.float32)
    out2 = shared_patch_net_cal(x_b, params, tm=32)
    jax.block_until_ready(out2)
    ref2 = reference(x_b, params)
    _check(out2, ref2, atol=8e-2, rtol=5e-2)

    print("KERNEL_OK")
</pallas_src>

<mosaic_0001>
module attributes {stable_mosaic.version = 11 : i64} {
  func.func @cellnet_cal_kernel(%arg0: i32, %arg1: memref<16x32xf32, #tpu.memory_space<vmem>>, %arg2: memref<32x32xf32, #tpu.memory_space<vmem>>, %arg3: memref<1x32xf32, #tpu.memory_space<vmem>>, %arg4: memref<32x8xf32, #tpu.memory_space<vmem>>, %arg5: memref<1x8xf32, #tpu.memory_space<vmem>>, %arg6: memref<16x32xf32, #tpu.memory_space<vmem>>, %arg7: memref<16x32xf32, #tpu.memory_space<vmem>>, %arg8: memref<16x4xf32, #tpu.memory_space<vmem>>, %arg9: memref<16x4xf32, #tpu.memory_space<vmem>>) attributes {dimension_semantics = [#tpu.dimension_semantics<parallel>], iteration_bounds = array<i64: 1>, scalar_prefetch = 0 : i64, scratch_operands = 0 : i64, tpu.core_type = #tpu.core_type<tc>, window_params = [{transform_indices = @transform_0, window_bounds = array<i64: 16, 32>}, {pipeline_mode = #tpu.pipeline_mode<synchronous>, transform_indices = @transform_1, window_bounds = array<i64: 32, 32>}, {pipeline_mode = #tpu.pipeline_mode<synchronous>, transform_indices = @transform_2, window_bounds = array<i64: 1, 32>}, {pipeline_mode = #tpu.pipeline_mode<synchronous>, transform_indices = @transform_3, window_bounds = array<i64: 32, 8>}, {pipeline_mode = #tpu.pipeline_mode<synchronous>, transform_indices = @transform_4, window_bounds = array<i64: 1, 8>}, {transform_indices = @transform_5, window_bounds = array<i64: 16, 32>}, {transform_indices = @transform_6, window_bounds = array<i64: 16, 32>}, {transform_indices = @transform_7, window_bounds = array<i64: 16, 4>}, {transform_indices = @transform_8, window_bounds = array<i64: 16, 4>}]} {
    %c0 = arith.constant 0 : index
    %c0_0 = arith.constant 0 : index
    %0 = vector.load %arg1[%c0, %c0_0] : memref<16x32xf32, #tpu.memory_space<vmem>>, vector<16x32xf32>
    %c0_1 = arith.constant 0 : index
    %c0_2 = arith.constant 0 : index
    %1 = vector.load %arg2[%c0_1, %c0_2] : memref<32x32xf32, #tpu.memory_space<vmem>>, vector<32x32xf32>
    %cst = arith.constant dense<0.000000e+00> : vector<16x32xf32>
    %2 = tpu.matmul %0, %1, %cst {dimension_numbers = #tpu.dot_dimension_numbers<[1], [0], [0], [1], [0, 0, 1, 1], [], []>} : vector<16x32xf32>, vector<32x32xf32>, vector<16x32xf32> -> vector<16x32xf32>
    %c0_3 = arith.constant 0 : index
    %c0_4 = arith.constant 0 : index
    %3 = vector.load %arg3[%c0_3, %c0_4] : memref<1x32xf32, #tpu.memory_space<vmem>>, vector<1x32xf32>
    %4 = vector.broadcast %3 : vector<1x32xf32> to vector<16x32xf32>
    %5 = arith.addf %2, %4 : vector<16x32xf32>
    %cst_5 = arith.constant 0.000000e+00 : f32
    %6 = vector.broadcast %cst_5 : f32 to vector<16x32xf32>
    %7 = arith.maximumf %5, %6 : vector<16x32xf32>
    %c0_6 = arith.constant 0 : index
    %c0_7 = arith.constant 0 : index
    %8 = vector.load %arg4[%c0_6, %c0_7] : memref<32x8xf32, #tpu.memory_space<vmem>>, vector<32x8xf32>
    %cst_8 = arith.constant dense<0.000000e+00> : vector<16x8xf32>
    %9 = tpu.matmul %7, %8, %cst_8 {dimension_numbers = #tpu.dot_dimension_numbers<[1], [0], [0], [1], [0, 0, 1, 1], [], []>} : vector<16x32xf32>, vector<32x8xf32>, vector<16x8xf32> -> vector<16x8xf32>
    %c0_9 = arith.constant 0 : index
    %c0_10 = arith.constant 0 : index
    %10 = vector.load %arg5[%c0_9, %c0_10] : memref<1x8xf32, #tpu.memory_space<vmem>>, vector<1x8xf32>
    %11 = vector.broadcast %10 : vector<1x8xf32> to vector<16x8xf32>
    %12 = arith.addf %9, %11 : vector<16x8xf32>
    %13 = vector.extract_strided_slice %12 {offsets = [0, 0], sizes = [16, 4], strides = [1, 1]} : vector<16x8xf32> to vector<16x4xf32>
    %14 = vector.extract_strided_slice %12 {offsets = [0, 4], sizes = [16, 4], strides = [1, 1]} : vector<16x8xf32> to vector<16x4xf32>
    %cst_11 = arith.constant dense<0xFF800000> : vector<16xf32>
    %15 = vector.multi_reduction <maximumf>, %14, %cst_11 [1] : vector<16x4xf32> to vector<16xf32>
    %16 = vector.shape_cast %15 : vector<16xf32> to vector<16x1xf32>
    %17 = vector.broadcast %16 : vector<16x1xf32> to vector<16x4xf32>
    %18 = arith.subf %14, %17 : vector<16x4xf32>
    %19 = math.exp %18 : vector<16x4xf32>
    %cst_12 = arith.constant dense<0.000000e+00> : vector<16xf32>
    %20 = vector.multi_reduction <add>, %19, %cst_12 [1] : vector<16x4xf32> to vector<16xf32>
    %21 = vector.shape_cast %20 : vector<16xf32> to vector<16x1xf32>
    %22 = tpu.reciprocal %21 : vector<16x1xf32> -> vector<16x1xf32>
    %23 = vector.broadcast %22 : vector<16x1xf32> to vector<16x4xf32>
    %24 = arith.mulf %19, %23 : vector<16x4xf32>
    %cst_13 = arith.constant 0.000000e+00 : f32
    %25 = vector.broadcast %cst_13 : f32 to vector<16x32xf32>
    %26 = arith.subf %25, %7 : vector<16x32xf32>
    %27 = math.exp %26 : vector<16x32xf32>
    %cst_14 = arith.constant 1.000000e+00 : f32
    %28 = vector.broadcast %cst_14 : f32 to vector<16x32xf32>
    %29 = arith.addf %28, %27 : vector<16x32xf32>
    %30 = tpu.reciprocal %29 : vector<16x32xf32> -> vector<16x32xf32>
    %c0_15 = arith.constant 0 : index
    %c0_16 = arith.constant 0 : index
    %31 = vector.load %arg6[%c0_15, %c0_16] : memref<16x32xf32, #tpu.memory_space<vmem>>, vector<16x32xf32>
    tpu.vector_store %arg6[%c0_15, %c0_16], %7 {strides = array<i32>} : memref<16x32xf32, #tpu.memory_space<vmem>>, vector<16x32xf32>,
    %c0_17 = arith.constant 0 : index
    %c0_18 = arith.constant 0 : index
    %32 = vector.load %arg7[%c0_17, %c0_18] : memref<16x32xf32, #tpu.memory_space<vmem>>, vector<16x32xf32>
    tpu.vector_store %arg7[%c0_17, %c0_18], %30 {strides = array<i32>} : memref<16x32xf32, #tpu.memory_space<vmem>>, vector<16x32xf32>,
    %c0_19 = arith.constant 0 : index
    %c0_20 = arith.constant 0 : index
    %33 = vector.load %arg8[%c0_19, %c0_20] : memref<16x4xf32, #tpu.memory_space<vmem>>, vector<16x4xf32>
    tpu.vector_store %arg8[%c0_19, %c0_20], %13 {strides = array<i32>} : memref<16x4xf32, #tpu.memory_space<vmem>>, vector<16x4xf32>,
    %c0_21 = arith.constant 0 : index
    %c0_22 = arith.constant 0 : index
    %34 = vector.load %arg9[%c0_21, %c0_22] : memref<16x4xf32, #tpu.memory_space<vmem>>, vector<16x4xf32>
    tpu.vector_store %arg9[%c0_21, %c0_22], %24 {strides = array<i32>} : memref<16x4xf32, #tpu.memory_space<vmem>>, vector<16x4xf32>,
    return
  }
  func.func @transform_0(%arg0: i32) -> (i32, i32) {
    %c0_i32 = arith.constant 0 : i32
    %c0_i32_0 = arith.constant 0 : i32
    return %arg0, %c0_i32 : i32, i32
  }
  func.func @transform_1(%arg0: i32) -> (i32, i32) {
    %c0_i32 = arith.constant 0 : i32
    %c0_i32_0 = arith.constant 0 : i32
    %c0_i32_1 = arith.constant 0 : i32
    return %c0_i32, %c0_i32_0 : i32, i32
  }
  func.func @transform_2(%arg0: i32) -> (i32, i32) {
    %c0_i32 = arith.constant 0 : i32
    %c0_i32_0 = arith.constant 0 : i32
    %c0_i32_1 = arith.constant 0 : i32
    return %c0_i32, %c0_i32_0 : i32, i32
  }
  func.func @transform_3(%arg0: i32) -> (i32, i32) {
    %c0_i32 = arith.constant 0 : i32
    %c0_i32_0 = arith.constant 0 : i32
    %c0_i32_1 = arith.constant 0 : i32
    return %c0_i32, %c0_i32_0 : i32, i32
  }
  func.func @transform_4(%arg0: i32) -> (i32, i32) {
    %c0_i32 = arith.constant 0 : i32
    %c0_i32_0 = arith.constant 0 : i32
    %c0_i32_1 = arith.constant 0 : i32
    return %c0_i32, %c0_i32_0 : i32, i32
  }
  func.func @transform_5(%arg0: i32) -> (i32, i32) {
    %c0_i32 = arith.constant 0 : i32
    %c0_i32_0 = arith.constant 0 : i32
    return %arg0, %c0_i32 : i32, i32
  }
  func.func @transform_6(%arg0: i32) -> (i32, i32) {
    %c0_i32 = arith.constant 0 : i32
    %c0_i32_0 = arith.constant 0 : i32
    return %arg0, %c0_i32 : i32, i32
  }
  func.func @transform_7(%arg0: i32) -> (i32, i32) {
    %c0_i32 = arith.constant 0 : i32
    %c0_i32_0 = arith.constant 0 : i32
    return %arg0, %c0_i32 : i32, i32
  }
  func.func @transform_8(%arg0: i32) -> (i32, i32) {
    %c0_i32 = arith.constant 0 : i32
    %c0_i32_0 = arith.constant 0 : i32
    return %arg0, %c0_i32 : i32, i32
  }
}

</mosaic_0001>

<llo_original>
// kernel: tpu_custom_call.1
$region0: #{tpu_custom_call.1}
  #allocation0 [shape = 'u32[]', space=smem, size = 0x4, offset = 0x4, fixed_abs, tag = 'smem constant byte address 0x4 - core index']
  #allocation1 [shape = 'u32[144,128]{1,0:T(1,128)}', space=vmem, size = 0x12000, scoped, tag = 'internal scratch']
  %s0 = inlined_call_operand.hbm [shape: f32[16,32], index: 0, kind: input, shape index: {}]
  %s1 = inlined_call_operand.vmem [shape: f32[32,32], index: 1, kind: input, shape index: {}]
  %s2 = inlined_call_operand.vmem [shape: f32[1,32], index: 2, kind: input, shape index: {}]
  %s3 = inlined_call_operand.vmem [shape: f32[32,8], index: 3, kind: input, shape index: {}]
  %s4 = inlined_call_operand.vmem [shape: f32[1,8], index: 4, kind: input, shape index: {}]
  %s5 = inlined_call_operand.hbm [shape: f32[16,32], index: 5, kind: output, shape index: {0}]
  %s6 = inlined_call_operand.hbm [shape: f32[16,32], index: 6, kind: output, shape index: {1}]
  %s7 = inlined_call_operand.vmem [shape: f32[16,4], index: 7, kind: output, shape index: {2}]
  %s8 = inlined_call_operand.vmem [shape: f32[16,4], index: 8, kind: output, shape index: {3}]
  %9 = xla_tuple %s5, %s6, %s7, %s8
  %s10 = sld [smem:[#allocation0]]
  $region58: #{tpu_custom_call.1} parent=0
    _
  %s12 = ssub.s32 1, %s10
  %s13 = scalar_select 0, %s12, %s10
  $region1: #{tpu_custom_call.1} parent=0
    #allocation2 [shape = 'u8[8192]{0}', space=vmem, size = 0x2000, scoped, tag = 'input window, operand 0, single buffered']
    #allocation3 [shape = 's32[1]{0}', space=sflag, size = 0x4, scoped, tag = 'scoped memory for tpu_custom_call.1']
    #allocation4 [shape = 's32[1]{0}', space=sflag, size = 0x4, scoped, tag = 'scoped memory for tpu_custom_call.1']
    #allocation5 [shape = 'u8[8192]{0}', space=vmem, size = 0x2000, scoped, tag = 'output window, operand 0, single buffered']
    #allocation6 [shape = 'u8[8192]{0}', space=vmem, size = 0x2000, scoped, tag = 'output window, operand 1, single buffered']
    #allocation7 [shape = 's32[1]{0}', space=sflag, size = 0x4, scoped, tag = 'scoped memory for tpu_custom_call.1']
    %14 = vsyncpa [#allocation3], 0
    %15 = vsyncpa [#allocation4], 0
    %16 = vsyncpa [#allocation7], 0
    // Predicated region
    $region2: #{tpu_custom_call.1} parent=1 // pred_check
      _
    $region3: #{tpu_custom_call.1} parent=1 // pred_check_branch
      %18 = sbr.rel (0) target = $region5
    $region4: #{tpu_custom_call.1} parent=1 // pred_region
      %s20 = ssub.s32 256, 256
      %21 = vsyncadd [#allocation3], %s20
      %s22 = sshll.u32 [#allocation2], 4
      %s23 = int_to_ptr.vmem [resolvable:$true] %s22
      %28 = dma.hbm_to_vmem [thread:$0]  %s0, 256, %s23, [#allocation3], 128, 128, 8
    $region5: #{tpu_custom_call.1} parent=1 // pred_fallthru
      _
    // Predicated region
    $region6: #{tpu_custom_call.1} parent=1 // pred_check
      _
    $region7: #{tpu_custom_call.1} parent=1 // pred_check_branch
      %30 = sbr.rel (0) target = $region9
    $region8: #{tpu_custom_call.1} parent=1 // pred_region
      _
    $region9: #{tpu_custom_call.1} parent=1 // pred_fallthru
      _
    // Predicated region
    $region10: #{tpu_custom_call.1} parent=1 // pred_check
      _
    $region11: #{tpu_custom_call.1} parent=1 // pred_check_branch
      %32 = sbr.rel (0) target = $region13
    $region12: #{tpu_custom_call.1} parent=1 // pred_region
      _
    $region13: #{tpu_custom_call.1} parent=1 // pred_fallthru
      _
    // Predicated region
    $region14: #{tpu_custom_call.1} parent=1 // pred_check
      _
    $region15: #{tpu_custom_call.1} parent=1 // pred_check_branch
      %34 = sbr.rel (0) target = $region17
    $region16: #{tpu_custom_call.1} parent=1 // pred_region
      _
    $region17: #{tpu_custom_call.1} parent=1 // pred_fallthru
      _
    // Predicated region
    $region18: #{tpu_custom_call.1} parent=1 // pred_check
      _
    $region19: #{tpu_custom_call.1} parent=1 // pred_check_branch
      %36 = sbr.rel (0) target = $region21
    $region20: #{tpu_custom_call.1} parent=1 // pred_region
      _
    $region21: #{tpu_custom_call.1} parent=1 // pred_fallthru
      _
    // Predicated region
    $region22: #{tpu_custom_call.1} parent=1 // pred_check
      _
    $region23: #{tpu_custom_call.1} parent=1 // pred_check_branch
      %38 = sbr.rel (0) target = $region25
    $region24: #{tpu_custom_call.1} parent=1 // pred_region
      %39 = dma.done [#allocation3], 256
    $region25: #{tpu_custom_call.1} parent=1 // pred_fallthru
      _
    %v40 = vld [vmem:[#allocation2] sm:$0xff]
    %v41 = vld [vmem:[#allocation2 + $0x8] sm:$0xff]
    %v42 = vld [vmem:[%s1] sm:$0xff]
    %v43 = vld [vmem:[%s1 + $0x8] sm:$0xff]
    %v44 = vld [vmem:[%s1 + $0x10] sm:$0xff]
    %v45 = vld [vmem:[%s1 + $0x18] sm:$0xff]
    %v46 = vld [vmem:[%s2] sm:$0x1]
    %v48 = vlaneseq
    %v49 = vshrl.u32 %v48, 7
    %v50 = vsub.s32 0, %v49
    %v51 = vrot.slane %v46, %v50
    %vm53 = vcmask 261120
    %v55 = vsel %vm53, %v40, 0
    %v58 = vsel %vm53, %v41, 0
    %60 = vmatprep.subr.mxu0 0.0
    %61 = vmatpush1.msra.mxu0 0.0
    %62 = vmatprep.subr.mxu0 0.0
    %63 = vmatpush1.msra.mxu0 0.0
    %64 = vmatprep.subr.mxu0 0.0
    %65 = vmatpush1.msra.mxu0 0.0
    %66 = vmatprep.subr.mxu0 0.0
    %67 = vmatpush1.msra.mxu0 0.0
    %68 = vmatprep.subr.mxu0 0.0
    %69 = vmatpush1.msra.mxu0 0.0
    %70 = vmatprep.subr.mxu0 0.0
    %71 = vmatpush1.msra.mxu0 0.0
    %72 = vmatprep.subr.mxu0 0.0
    %73 = vmatpush1.msra.mxu0 0.0
    %74 = vmatprep.subr.mxu0 0.0
    %75 = vmatpush1.msra.mxu0 0.0
    %76 = vmatprep.subr.mxu0 0.0
    %77 = vmatpush1.msra.mxu0 0.0
    %78 = vmatprep.subr.mxu0 0.0
    %79 = vmatpush1.msra.mxu0 0.0
    %80 = vmatprep.subr.mxu0 0.0
    %81 = vmatpush1.msra.mxu0 0.0
    %82 = vmatprep.subr.mxu0 0.0
    %83 = vmatpush1.msra.mxu0 0.0
    %84 = vmatprep.subr.mxu0 0.0
    %85 = vmatpush1.msra.mxu0 %v45
    %86 = vmatprep.subr.mxu0 0.0
    %87 = vmatpush1.msra.mxu0 %v44
    %88 = vmatprep.subr.mxu0 0.0
    %89 = vmatpush1.msra.mxu0 %v43
    %90 = vmatprep.subr.mxu0 0.0
    %91 = vmatpush1.msra.mxu0 %v42
    %92 = vmatprep.subr.mxu0 0.0
    %93 = vmatpush2.msra.mxu0 0.0
    %94 = vmatprep.subr.mxu0 0.0
    %95 = vmatpush2.msra.mxu0 0.0
    %96 = vmatprep.subr.mxu0 0.0
    %97 = vmatpush2.msra.mxu0 0.0
    %98 = vmatprep.subr.mxu0 0.0
    %99 = vmatpush2.msra.mxu0 0.0
    %100 = vmatprep.subr.mxu0 0.0
    %101 = vmatpush2.msra.mxu0 0.0
    %102 = vmatprep.subr.mxu0 0.0
    %103 = vmatpush2.msra.mxu0 0.0
    %104 = vmatprep.subr.mxu0 0.0
    %105 = vmatpush2.msra.mxu0 0.0
    %106 = vmatprep.subr.mxu0 0.0
    %107 = vmatpush2.msra.mxu0 0.0
    %108 = vmatprep.subr.mxu0 0.0
    %109 = vmatpush2.msra.mxu0 0.0
    %110 = vmatprep.subr.mxu0 0.0
    %111 = vmatpush2.msra.mxu0 0.0
    %112 = vmatprep.subr.mxu0 0.0
    %113 = vmatpush2.msra.mxu0 0.0
    %114 = vmatprep.subr.mxu0 0.0
    %115 = vmatpush2.msra.mxu0 0.0
    %116 = vmatprep.subr.mxu0 0.0
    %117 = vmatpush2.msra.mxu0 0.0
    %118 = vmatprep.subr.mxu0 0.0
    %119 = vmatpush2.msra.mxu0 0.0
    %120 = vmatprep.subr.mxu0 0.0
    %121 = vmatpush2.msra.mxu0 0.0
    %122 = vmatprep.subr.mxu0 0.0
    %123 = vmatpush2.msra.mxu0 0.0
    %124 = vmatprep.mubr.f32.mxu0 0.0
    %125 = vmatmul.mubr.f32.gmra.mxu0 %v55
    %v126 = vpop.f32.mrf.mxu0
    %v127 = vadd.f32 %v51, %v126
    %v128 = vpop.f32.mrf.mxu0
    %129 = vmatprep.mubr.f32.mxu0 0.0
    %130 = vmatmul.mubr.f32.gmra.mxu0 %v58
    %v131 = vpop.f32.mrf.mxu0
    %v132 = vadd.f32 %v51, %v131
    %v133 = vpop.f32.mrf.mxu0
    %134 = vdwg.mxu0
    %v135 = vmax.f32 %v127, 0.0
    %v136 = vmax.f32 %v132, 0.0
    %v137 = vld [vmem:[%s3] sm:$0xff]
    %v138 = vld [vmem:[%s3 + $0x8] sm:$0xff]
    %v139 = vld [vmem:[%s3 + $0x10] sm:$0xff]
    %v140 = vld [vmem:[%s3 + $0x18] sm:$0xff]
    %v141 = vld [vmem:[%s4] sm:$0x1]
    %v143 = vlaneseq
    %v144 = vshrl.u32 %v143, 7
    %v145 = vsub.s32 0, %v144
    %v146 = vrot.slane %v141, %v145
    %v149 = vsel %vm53, %v135, 0
    %v152 = vsel %vm53, %v136, 0
    %154 = vmatprep.subr.mxu0 0.0
    %155 = vmatpush1.msra.mxu0 0.0
    %156 = vmatprep.subr.mxu0 0.0
    %157 = vmatpush1.msra.mxu0 0.0
    %158 = vmatprep.subr.mxu0 0.0
    %159 = vmatpush1.msra.mxu0 0.0
    %160 = vmatprep.subr.mxu0 0.0
    %161 = vmatpush1.msra.mxu0 0.0
    %162 = vmatprep.subr.mxu0 0.0
    %163 = vmatpush1.msra.mxu0 0.0
    %164 = vmatprep.subr.mxu0 0.0
    %165 = vmatpush1.msra.mxu0 0.0
    %166 = vmatprep.subr.mxu0 0.0
    %167 = vmatpush1.msra.mxu0 0.0
    %168 = vmatprep.subr.mxu0 0.0
    %169 = vmatpush1.msra.mxu0 0.0
    %170 = vmatprep.subr.mxu0 0.0
    %171 = vmatpush1.msra.mxu0 0.0
    %172 = vmatprep.subr.mxu0 0.0
    %173 = vmatpush1.msra.mxu0 0.0
    %174 = vmatprep.subr.mxu0 0.0
    %175 = vmatpush1.msra.mxu0 0.0
    %176 = vmatprep.subr.mxu0 0.0
    %177 = vmatpush1.msra.mxu0 0.0
    %178 = vmatprep.subr.mxu0 0.0
    %179 = vmatpush1.msra.mxu0 %v140
    %180 = vmatprep.subr.mxu0 0.0
    %181 = vmatpush1.msra.mxu0 %v139
    %182 = vmatprep.subr.mxu0 0.0
    %183 = vmatpush1.msra.mxu0 %v138
    %184 = vmatprep.subr.mxu0 0.0
    %185 = vmatpush1.msra.mxu0 %v137
    %186 = vmatprep.subr.mxu0 0.0
    %187 = vmatpush2.msra.mxu0 0.0
    %188 = vmatprep.subr.mxu0 0.0
    %189 = vmatpush2.msra.mxu0 0.0
    %190 = vmatprep.subr.mxu0 0.0
    %191 = vmatpush2.msra.mxu0 0.0
    %192 = vmatprep.subr.mxu0 0.0
    %193 = vmatpush2.msra.mxu0 0.0
    %194 = vmatprep.subr.mxu0 0.0
    %195 = vmatpush2.msra.mxu0 0.0
    %196 = vmatprep.subr.mxu0 0.0
    %197 = vmatpush2.msra.mxu0 0.0
    %198 = vmatprep.subr.mxu0 0.0
    %199 = vmatpush2.msra.mxu0 0.0
    %200 = vmatprep.subr.mxu0 0.0
    %201 = vmatpush2.msra.mxu0 0.0
    %202 = vmatprep.subr.mxu0 0.0
    %203 = vmatpush2.msra.mxu0 0.0
    %204 = vmatprep.subr.mxu0 0.0
    %205 = vmatpush2.msra.mxu0 0.0
    %206 = vmatprep.subr.mxu0 0.0
    %207 = vmatpush2.msra.mxu0 0.0
    %208 = vmatprep.subr.mxu0 0.0
    %209 = vmatpush2.msra.mxu0 0.0
    %210 = vmatprep.subr.mxu0 0.0
    %211 = vmatpush2.msra.mxu0 0.0
    %212 = vmatprep.subr.mxu0 0.0
    %213 = vmatpush2.msra.mxu0 0.0
    %214 = vmatprep.subr.mxu0 0.0
    %215 = vmatpush2.msra.mxu0 0.0
    %216 = vmatprep.subr.mxu0 0.0
    %217 = vmatpush2.msra.mxu0 0.0
    %218 = vmatprep.mubr.f32.mxu0 0.0
    %219 = vmatmul.mubr.f32.gmra.mxu0 %v149
    %v220 = vpop.f32.mrf.mxu0
    %v221 = vadd.f32 %v146, %v220
    %v222 = vpop.f32.mrf.mxu0
    %223 = vmatprep.mubr.f32.mxu0 0.0
    %224 = vmatmul.mubr.f32.gmra.mxu0 %v152
    %v225 = vpop.f32.mrf.mxu0
    %v226 = vadd.f32 %v146, %v225
    %v227 = vpop.f32.mrf.mxu0
    %228 = vdwg.mxu0
    %vm229 = vcmask 64544
    %v230 = vsel %vm229, %v221, -inf
    %231 = vmax.xlane.f32.xlu0 %v230
    %v232 = vpop.xlane.xlu0 %231
    %v233 = vsel %vm229, %v226, -inf
    %234 = vmax.xlane.f32.xlu0 %v233
    %v235 = vpop.xlane.xlu0 %234
    %v236 = vsub.f32 %v221, %v232
    %v237 = vsub.f32 %v226, %v235
    %v238 = vmul.f32 %v236, 1.442695
    %v239 = vpow.pop %v238
    %v240 = vmul.f32 %v237, 1.442695
    %v241 = vpow.pop %v240
    %244 = vrot.lane.b32.xlu0 %v239, 124
    %v245 = vpop.permute.xlu0 %244
    %246 = vrot.lane.b32.xlu0 %v241, 124
    %v247 = vpop.permute.xlu0 %246
    %vm250 = vcmask 31744
    %v251 = vsel %vm250, %v245, 0.0
    %252 = vadd.xlane.f32.xlu0 %v251
    %v253 = vpop.xlane.xlu0 %252
    %v254 = vsel %vm250, %v247, 0.0
    %255 = vadd.xlane.f32.xlu0 %v254
    %v256 = vpop.xlane.xlu0 %255
    %v257 = vrcp.pop %v253
    %v258 = vrcp.pop %v256
    %v259 = vmul.f32 %v239, %v257
    %v260 = vmul.f32 %v241, %v258
    %v261 = vsub.f32 0.0, %v135
    %v262 = vsub.f32 0.0, %v136
    %v263 = vmul.f32 %v261, 1.442695
    %v264 = vpow.pop %v263
    %v265 = vmul.f32 %v262, 1.442695
    %v266 = vpow.pop %v265
    %v267 = vadd.f32 %v264, 1.0
    %v268 = vadd.f32 %v266, 1.0
    %v269 = vrcp.pop %v267
    %v270 = vrcp.pop %v268
    %271 = vst.msk [vmem:[#allocation5] sm:$0xff] %vm53, %v135
    %272 = vst.msk [vmem:[#allocation5 + $0x8] sm:$0xff] %vm53, %v136
    %273 = vst.msk [vmem:[#allocation6] sm:$0xff] %vm53, %v269
    %274 = vst.msk [vmem:[#allocation6 + $0x8] sm:$0xff] %vm53, %v270
    %275 = vst.msk [vmem:[%s7] sm:$0xff] %vm250, %v221
    %276 = vst.msk [vmem:[%s7 + $0x8] sm:$0xff] %vm250, %v226
    %279 = vrot.lane.b32.xlu0 %v259, 124
    %v280 = vpop.permute.xlu0 %279
    %281 = vrot.lane.b32.xlu0 %v260, 124
    %v282 = vpop.permute.xlu0 %281
    %285 = vst.msk [vmem:[%s8] sm:$0xff] %vm250, %v280
    %286 = vst.msk [vmem:[%s8 + $0x8] sm:$0xff] %vm250, %v282
    // Predicated region
    $region26: #{tpu_custom_call.1} parent=1 // pred_check
      _
    $region27: #{tpu_custom_call.1} parent=1 // pred_check_branch
      %288 = sbr.rel (0) target = $region29
    $region28: #{tpu_custom_call.1} parent=1 // pred_region
      %s290 = ssub.s32 256, 256
      %291 = vsyncadd [#allocation4], %s290
      %s292 = sshll.u32 [#allocation5], 4
      %s293 = int_to_ptr.vmem [resolvable:$true] %s292
      %298 = dma.vmem_to_hbm [thread:$0]  %s293, 256, %s5, [#allocation4], 128, 128, 8
    $region29: #{tpu_custom_call.1} parent=1 // pred_fallthru
      _
    // Predicated region
    $region30: #{tpu_custom_call.1} parent=1 // pred_check
      _
    $region31: #{tpu_custom_call.1} parent=1 // pred_check_branch
      %300 = sbr.rel (0) target = $region33
    $region32: #{tpu_custom_call.1} parent=1 // pred_region
      %s302 = ssub.s32 256, 256
      %303 = vsyncadd [#allocation7], %s302
      %s304 = sshll.u32 [#allocation6], 4
      %s305 = int_to_ptr.vmem [resolvable:$true] %s304
      %310 = dma.vmem_to_hbm [thread:$0]  %s305, 256, %s6, [#allocation7], 128, 128, 8
    $region33: #{tpu_custom_call.1} parent=1 // pred_fallthru
      _
    // Predicated region
    $region34: #{tpu_custom_call.1} parent=1 // pred_check
      _
    $region35: #{tpu_custom_call.1} parent=1 // pred_check_branch
      %312 = sbr.rel (0) target = $region37
    $region36: #{tpu_custom_call.1} parent=1 // pred_region
      _
    $region37: #{tpu_custom_call.1} parent=1 // pred_fallthru
      _
    // Predicated region
    $region38: #{tpu_custom_call.1} parent=1 // pred_check
      _
    $region39: #{tpu_custom_call.1} parent=1 // pred_check_branch
      %314 = sbr.rel (0) target = $region41
    $region40: #{tpu_custom_call.1} parent=1 // pred_region
      _
    $region41: #{tpu_custom_call.1} parent=1 // pred_fallthru
      _
    // Predicated region
    $region42: #{tpu_custom_call.1} parent=1 // pred_check
      _
    $region43: #{tpu_custom_call.1} parent=1 // pred_check_branch
      %316 = sbr.rel (0) target = $region45
    $region44: #{tpu_custom_call.1} parent=1 // pred_region
      %317 = dma.done [#allocation4], 256
    $region45: #{tpu_custom_call.1} parent=1 // pred_fallthru
      _
    // Predicated region
    $region46: #{tpu_custom_call.1} parent=1 // pred_check
      _
    $region47: #{tpu_custom_call.1} parent=1 // pred_check_branch
      %319 = sbr.rel (0) target = $region49
    $region48: #{tpu_custom_call.1} parent=1 // pred_region
      %320 = dma.done [#allocation7], 256
    $region49: #{tpu_custom_call.1} parent=1 // pred_fallthru
      _
    // Predicated region
    $region50: #{tpu_custom_call.1} parent=1 // pred_check
      _
    $region51: #{tpu_custom_call.1} parent=1 // pred_check_branch
      %322 = sbr.rel (0) target = $region53
    $region52: #{tpu_custom_call.1} parent=1 // pred_region
      _
    $region53: #{tpu_custom_call.1} parent=1 // pred_fallthru
      _
    // Predicated region
    $region54: #{tpu_custom_call.1} parent=1 // pred_check
      _
    $region55: #{tpu_custom_call.1} parent=1 // pred_check_branch
      %324 = sbr.rel (0) target = $region57
    $region56: #{tpu_custom_call.1} parent=1 // pred_region
      _
    $region57: #{tpu_custom_call.1} parent=1 // pred_fallthru
      _
    %325 = vsyncpa [#allocation3], 1
    %326 = vsyncpa [#allocation4], 1
    %327 = vsyncpa [#allocation7], 1

</llo_original>
